<compile_context>
chip_gen: v6e
topology: v6e:2x2x1
jax: 0.10.0
libtpu: 0.0.40
codegen_flags: <defaults>
</compile_context>

<pallas_src>
import jax
import jax.numpy as jnp
from jax.experimental import pallas as pl
from jax.experimental.pallas import tpu as pltpu


def _similarity_kernel(x_ref, xm_ref, yt_ref, ym_ref, o_ref):
    """One (TN, TM) tile of the Gram matrix.

    x_ref : (TN, D)  f32  pre-scaled descriptors of a tile of `first`
    xm_ref: (TN, 2)  f32  col 0 = |x|^2 (pre-scaled), col 1 = lone/number code
    yt_ref: (D, TM)  f32  pre-scaled, pre-transposed descriptors of a tile of `second`
    ym_ref: (2, TM)  f32  row 0 = |y|^2 (pre-scaled), row 1 = lone/number code
    o_ref : (TN, TM) f32  output Gram tile
    """
    x = x_ref[...]                                   # (TN, D)
    yt = yt_ref[...]                                 # (D, TM)

    # MXU: x @ y^T with f32 accumulation (y already transposed in the wrapper).
    xy = jnp.dot(x, yt, preferred_element_type=jnp.float32)   # (TN, TM)

    xn = xm_ref[:, 0:1]                              # (TN, 1)
    xcode = xm_ref[:, 1:2]                           # (TN, 1)
    yn = ym_ref[0:1, :]                              # (1, TM)
    ycode = ym_ref[1:2, :]                           # (1, TM)

    # exp argument = -d2 / (2*l^2) with the scale folded into x, y.
    # Clamp to <= 0 (equivalent to clamping d2 >= 0 against cancellation).
    arg = jnp.minimum(2.0 * xy - xn - yn, 0.0)       # (TN, TM)
    kern = jnp.exp(arg)

    # lone_atoms: codes match only when BOTH are lone AND numbers agree
    # (non-lone rows get -1, non-lone cols get -2, so they never match).
    lone = (xcode == ycode).astype(jnp.float32)      # (TN, TM)

    o_ref[...] = kern + lone


def _round_up(a, b):
    return ((a + b - 1) // b) * b


def similarity_forward(x_desc, x_num, x_lone, y_desc, y_num, y_lone,
                       *, lengthscale, tile_n=256, tile_m=512):
    """Pallas-backed SimilarityKernel.forward(first, second, operation='func').

    x_desc: (N, D) descriptors of `first`;  x_num: (N,) atomic numbers;
    x_lone: (N,) 1.0 if the environment has no neighbors else 0.0.
    y_desc/y_num/y_lone: same for `second`.
    Returns the (N, M) float32 Gram matrix.
    """
    N, D = x_desc.shape
    M, _ = y_desc.shape
    if N == 0 or M == 0:
        return jnp.zeros((N, M), jnp.float32)

    assert tile_n % 8 == 0 and tile_m % 128 == 0

    # Fold the lengthscale into the descriptors.
    inv_two_l2 = 1.0 / (2.0 * float(lengthscale) ** 2)
    scale = jnp.float32(inv_two_l2 ** 0.5)
    xs = x_desc.astype(jnp.float32) * scale
    ys = y_desc.astype(jnp.float32) * scale

    # Tile sizes: shrink for small problems but keep (8, 128) alignment.
    tn = min(tile_n, _round_up(N, 8))
    tm = min(tile_m, _round_up(M, 128))
    n_pad = _round_up(N, tn)
    m_pad = _round_up(M, tm)

    # ---- x side (rows): padded descriptors + (|x|^2, code) metadata ----------
    xs_p = jnp.zeros((n_pad, D), jnp.float32).at[:N].set(xs)
    xn_p = jnp.zeros((n_pad, 1), jnp.float32).at[:N, 0].set(jnp.sum(xs * xs, axis=-1))
    xcode = jnp.where(x_lone.astype(jnp.float32) > 0.0,
                      x_num.astype(jnp.float32), jnp.float32(-1.0))
    xcode_p = jnp.full((n_pad, 1), -1.0, jnp.float32).at[:N, 0].set(xcode)
    xm_p = jnp.concatenate([xn_p, xcode_p], axis=1)                 # (n_pad, 2)

    # ---- y side (cols): pre-transposed descriptors + lane-dense metadata -----
    yt_p = jnp.zeros((D, m_pad), jnp.float32).at[:, :M].set(ys.T)
    yn_p = jnp.zeros((1, m_pad), jnp.float32).at[0, :M].set(jnp.sum(ys * ys, axis=-1))
    ycode = jnp.where(y_lone.astype(jnp.float32) > 0.0,
                      y_num.astype(jnp.float32), jnp.float32(-2.0))
    ycode_p = jnp.full((1, m_pad), -2.0, jnp.float32).at[0, :M].set(ycode)
    ym_p = jnp.concatenate([yn_p, ycode_p], axis=0)                 # (2, m_pad)

    grid = (n_pad // tn, m_pad // tm)

    # VMEM budget: double-buffered inputs + output tile, with headroom,
    # floored at 32 MiB and capped at 64 MiB (safe for v7x physical VMEM).
    per_step_bytes = 4 * (tn * D + tn * 2 + D * tm + 2 * tm + tn * tm)
    vmem_bytes = int(min(max(4 * per_step_bytes, 32 * 1024 * 1024),
                         64 * 1024 * 1024))

    out_pad = pl.pallas_call(
        _similarity_kernel,
        out_shape=jax.ShapeDtypeStruct((n_pad, m_pad), jnp.float32),
        grid_spec=pltpu.PrefetchScalarGridSpec(
            num_scalar_prefetch=0,
            grid=grid,
            in_specs=[
                pl.BlockSpec((tn, D), lambda i, j: (i, 0)),    # x tile
                pl.BlockSpec((tn, 2), lambda i, j: (i, 0)),    # x metadata
                pl.BlockSpec((D, tm), lambda i, j: (0, j)),    # y^T tile
                pl.BlockSpec((2, tm), lambda i, j: (0, j)),    # y metadata
            ],
            out_specs=pl.BlockSpec((tn, tm), lambda i, j: (i, j)),
        ),
        compiler_params=pltpu.CompilerParams(
            dimension_semantics=("parallel", "parallel"),
            vmem_limit_bytes=vmem_bytes,
        ),
    )(xs_p, xm_p, yt_p, ym_p)

    return out_pad[:N, :M]


def similarity_forward_ref(x_desc, x_num, x_lone, y_desc, y_num, y_lone,
                           *, lengthscale):
    """Pure-JAX reference for correctness checking."""
    d2 = jnp.sum((x_desc[:, None, :] - y_desc[None, :, :]) ** 2, axis=-1)
    kern = jnp.exp(-d2 / (2.0 * lengthscale ** 2))
    same = (x_num[:, None] == y_num[None, :]).astype(jnp.float32)
    lone = x_lone[:, None] * y_lone[None, :] * same
    return kern + lone


if __name__ == "__main__":
    # Deterministic "parameters" (stand-in for self.kern.params).
    LENGTHSCALE = 0.7

    # Small synthetic shapes: N environments in `first`, M in `second`,
    # each described by a D-dim descriptor vector.
    N, M, D = 16, 16, 32

    key = jax.random.PRNGKey(0)
    kx, ky, knx, kny, klx, kly = jax.random.split(key, 6)

    x_desc = jax.random.normal(kx, (N, D), dtype=jnp.float32)
    y_desc = jax.random.normal(ky, (M, D), dtype=jnp.float32)

    # metadata: atomic numbers and "lone" (no-neighbor) flags
    x_num = jax.random.randint(knx, (N,), 1, 4).astype(jnp.float32)
    y_num = jax.random.randint(kny, (M,), 1, 4).astype(jnp.float32)
    x_lone = (jax.random.uniform(klx, (N,)) < 0.25).astype(jnp.float32)
    y_lone = (jax.random.uniform(kly, (M,)) < 0.25).astype(jnp.float32)

    out = similarity_forward(x_desc, x_num, x_lone, y_desc, y_num, y_lone,
                             lengthscale=LENGTHSCALE)
    out = jax.block_until_ready(out)

    ref = similarity_forward_ref(x_desc, x_num, x_lone, y_desc, y_num, y_lone,
                                 lengthscale=LENGTHSCALE)
    assert out.shape == (N, M)
    assert jnp.allclose(out, ref, atol=1e-4, rtol=1e-4)

    # TODO(synk): leftgrad/rightgrad/gradgrad variants (derivative blocks of the
    # kernel w.r.t. atomic positions) are subclass-specific and not implemented.
    print("KERNEL_OK")
</pallas_src>

<mosaic_0001>
module attributes {stable_mosaic.version = 11 : i64} {
  func.func @_similarity_kernel(%arg0: i32, %arg1: i32, %arg2: memref<16x32xf32, #tpu.memory_space<vmem>>, %arg3: memref<16x2xf32, #tpu.memory_space<vmem>>, %arg4: memref<32x128xf32, #tpu.memory_space<vmem>>, %arg5: memref<2x128xf32, #tpu.memory_space<vmem>>, %arg6: memref<16x128xf32, #tpu.memory_space<vmem>>) attributes {dimension_semantics = [#tpu.dimension_semantics<parallel>, #tpu.dimension_semantics<parallel>], iteration_bounds = array<i64: 1, 1>, scalar_prefetch = 0 : i64, scratch_operands = 0 : i64, tpu.core_type = #tpu.core_type<tc>, window_params = [{transform_indices = @transform_0, window_bounds = array<i64: 16, 32>}, {transform_indices = @transform_1, window_bounds = array<i64: 16, 2>}, {transform_indices = @transform_2, window_bounds = array<i64: 32, 128>}, {transform_indices = @transform_3, window_bounds = array<i64: 2, 128>}, {transform_indices = @transform_4, window_bounds = array<i64: 16, 128>}]} {
    %c0 = arith.constant 0 : index
    %c0_0 = arith.constant 0 : index
    %0 = vector.load %arg2[%c0, %c0_0] : memref<16x32xf32, #tpu.memory_space<vmem>>, vector<16x32xf32>
    %c0_1 = arith.constant 0 : index
    %c0_2 = arith.constant 0 : index
    %1 = vector.load %arg4[%c0_1, %c0_2] : memref<32x128xf32, #tpu.memory_space<vmem>>, vector<32x128xf32>
    %cst = arith.constant dense<0.000000e+00> : vector<16x128xf32>
    %2 = tpu.matmul %0, %1, %cst {dimension_numbers = #tpu.dot_dimension_numbers<[1], [0], [0], [1], [0, 0, 1, 1], [], []>} : vector<16x32xf32>, vector<32x128xf32>, vector<16x128xf32> -> vector<16x128xf32>
    %c0_3 = arith.constant 0 : index
    %c0_4 = arith.constant 0 : index
    %3 = vector.load %arg3[%c0_3, %c0_4] : memref<16x2xf32, #tpu.memory_space<vmem>>, vector<16x1xf32>
    %c0_5 = arith.constant 0 : index
    %c1 = arith.constant 1 : index
    %4 = vector.load %arg3[%c0_5, %c1] : memref<16x2xf32, #tpu.memory_space<vmem>>, vector<16x1xf32>
    %c0_6 = arith.constant 0 : index
    %c0_7 = arith.constant 0 : index
    %5 = vector.load %arg5[%c0_6, %c0_7] : memref<2x128xf32, #tpu.memory_space<vmem>>, vector<1x128xf32>
    %c1_8 = arith.constant 1 : index
    %c0_9 = arith.constant 0 : index
    %6 = vector.load %arg5[%c1_8, %c0_9] : memref<2x128xf32, #tpu.memory_space<vmem>>, vector<1x128xf32>
    %cst_10 = arith.constant 2.000000e+00 : f32
    %7 = vector.broadcast %cst_10 : f32 to vector<16x128xf32>
    %8 = arith.mulf %7, %2 : vector<16x128xf32>
    %9 = vector.broadcast %3 : vector<16x1xf32> to vector<16x128xf32>
    %10 = arith.subf %8, %9 : vector<16x128xf32>
    %11 = vector.broadcast %5 : vector<1x128xf32> to vector<16x128xf32>
    %12 = arith.subf %10, %11 : vector<16x128xf32>
    %cst_11 = arith.constant 0.000000e+00 : f32
    %13 = vector.broadcast %cst_11 : f32 to vector<16x128xf32>
    %14 = arith.minimumf %12, %13 : vector<16x128xf32>
    %15 = math.exp %14 : vector<16x128xf32>
    %16 = vector.broadcast %4 : vector<16x1xf32> to vector<16x128xf32>
    %17 = vector.broadcast %6 : vector<1x128xf32> to vector<16x128xf32>
    %18 = arith.cmpf oeq, %16, %17 : vector<16x128xf32>
    %19 = arith.extui %18 : vector<16x128xi1> to vector<16x128xi32>
    %20 = arith.sitofp %19 : vector<16x128xi32> to vector<16x128xf32>
    %21 = arith.addf %15, %20 : vector<16x128xf32>
    %c0_12 = arith.constant 0 : index
    %c0_13 = arith.constant 0 : index
    %22 = vector.load %arg6[%c0_12, %c0_13] : memref<16x128xf32, #tpu.memory_space<vmem>>, vector<16x128xf32>
    tpu.vector_store %arg6[%c0_12, %c0_13], %21 {strides = array<i32>} : memref<16x128xf32, #tpu.memory_space<vmem>>, vector<16x128xf32>,
    return
  }
  func.func @transform_0(%arg0: i32, %arg1: i32) -> (i32, i32) {
    %c0_i32 = arith.constant 0 : i32
    %c0_i32_0 = arith.constant 0 : i32
    return %arg0, %c0_i32 : i32, i32
  }
  func.func @transform_1(%arg0: i32, %arg1: i32) -> (i32, i32) {
    %c0_i32 = arith.constant 0 : i32
    %c0_i32_0 = arith.constant 0 : i32
    return %arg0, %c0_i32 : i32, i32
  }
  func.func @transform_2(%arg0: i32, %arg1: i32) -> (i32, i32) {
    %c0_i32 = arith.constant 0 : i32
    %c0_i32_0 = arith.constant 0 : i32
    return %c0_i32, %arg1 : i32, i32
  }
  func.func @transform_3(%arg0: i32, %arg1: i32) -> (i32, i32) {
    %c0_i32 = arith.constant 0 : i32
    %c0_i32_0 = arith.constant 0 : i32
    return %c0_i32, %arg1 : i32, i32
  }
  func.func @transform_4(%arg0: i32, %arg1: i32) -> (i32, i32) {
    %c0_i32 = arith.constant 0 : i32
    return %arg0, %arg1 : i32, i32
  }
}

</mosaic_0001>

<llo_original>
// kernel: tpu_custom_call.1
$region0: #{tpu_custom_call.1}
  #allocation0 [shape = 'u32[]', space=smem, size = 0x4, offset = 0x4, fixed_abs, tag = 'smem constant byte address 0x4 - core index']
  #allocation1 [shape = 'u32[144,128]{1,0:T(1,128)}', space=vmem, size = 0x12000, scoped, tag = 'internal scratch']
  %s0 = inlined_call_operand.vmem [shape: f32[16,32], index: 0, kind: input, shape index: {}]
  %s1 = inlined_call_operand.vmem [shape: f32[16,2], index: 1, kind: input, shape index: {}]
  %s2 = inlined_call_operand.hbm [shape: f32[32,128], index: 2, kind: input, shape index: {}]
  %s3 = inlined_call_operand.vmem [shape: f32[2,128], index: 3, kind: input, shape index: {}]
  %s4 = inlined_call_operand.hbm [shape: f32[16,128], index: 4, kind: output, shape index: {}]
  %s5 = sld [smem:[#allocation0]]
  $region30: #{tpu_custom_call.1} parent=0
    _
  %s7 = ssub.s32 1, %s5
  %s8 = scalar_select 0, %s7, %s5
  $region1: #{tpu_custom_call.1} parent=0
    #allocation2 [shape = 'u8[16384]{0}', space=vmem, size = 0x4000, scoped, tag = 'input window, operand 2, single buffered']
    #allocation3 [shape = 's32[1]{0}', space=sflag, size = 0x4, scoped, tag = 'scoped memory for tpu_custom_call.1']
    #allocation4 [shape = 's32[1]{0}', space=sflag, size = 0x4, scoped, tag = 'scoped memory for tpu_custom_call.1']
    #allocation5 [shape = 'u8[8192]{0}', space=vmem, size = 0x2000, scoped, tag = 'output window, operand 0, single buffered']
    %9 = vsyncpa [#allocation3], 0
    %10 = vsyncpa [#allocation4], 0
    // Predicated region
    $region2: #{tpu_custom_call.1} parent=1 // pred_check
      _
    $region3: #{tpu_custom_call.1} parent=1 // pred_check_branch
      %12 = sbr.rel (0) target = $region5
    $region4: #{tpu_custom_call.1} parent=1 // pred_region
      _
    $region5: #{tpu_custom_call.1} parent=1 // pred_fallthru
      _
    // Predicated region
    $region6: #{tpu_custom_call.1} parent=1 // pred_check
      _
    $region7: #{tpu_custom_call.1} parent=1 // pred_check_branch
      %14 = sbr.rel (0) target = $region9
    $region8: #{tpu_custom_call.1} parent=1 // pred_region
      _
    $region9: #{tpu_custom_call.1} parent=1 // pred_fallthru
      _
    // Predicated region
    $region10: #{tpu_custom_call.1} parent=1 // pred_check
      _
    $region11: #{tpu_custom_call.1} parent=1 // pred_check_branch
      %16 = sbr.rel (0) target = $region13
    $region12: #{tpu_custom_call.1} parent=1 // pred_region
      %s18 = ssub.s32 512, 512
      %19 = vsyncadd [#allocation3], %s18
      %s20 = sshll.u32 [#allocation2], 4
      %s21 = int_to_ptr.vmem [resolvable:$true] %s20
      %26 = dma.hbm_to_vmem [thread:$0]  %s2, 512, %s21, [#allocation3], 128, 128, 8
    $region13: #{tpu_custom_call.1} parent=1 // pred_fallthru
      _
    // Predicated region
    $region14: #{tpu_custom_call.1} parent=1 // pred_check
      _
    $region15: #{tpu_custom_call.1} parent=1 // pred_check_branch
      %28 = sbr.rel (0) target = $region17
    $region16: #{tpu_custom_call.1} parent=1 // pred_region
      _
    $region17: #{tpu_custom_call.1} parent=1 // pred_fallthru
      _
    // Predicated region
    $region18: #{tpu_custom_call.1} parent=1 // pred_check
      _
    $region19: #{tpu_custom_call.1} parent=1 // pred_check_branch
      %30 = sbr.rel (0) target = $region21
    $region20: #{tpu_custom_call.1} parent=1 // pred_region
      %31 = dma.done [#allocation3], 512
    $region21: #{tpu_custom_call.1} parent=1 // pred_fallthru
      _
    %v32 = vld [vmem:[%s0] sm:$0xff]
    %v33 = vld [vmem:[%s0 + $0x8] sm:$0xff]
    %v34 = vld [vmem:[#allocation2] sm:$0xff]
    %v35 = vld [vmem:[#allocation2 + $0x8] sm:$0xff]
    %v36 = vld [vmem:[#allocation2 + $0x10] sm:$0xff]
    %v37 = vld [vmem:[#allocation2 + $0x18] sm:$0xff]
    %vm38 = vcmask 261120
    %v40 = vsel %vm38, %v32, 0
    %v43 = vsel %vm38, %v33, 0
    %45 = vmatprep.subr.mxu0 0.0
    %46 = vmatpush1.msra.mxu0 0.0
    %47 = vmatprep.subr.mxu0 0.0
    %48 = vmatpush1.msra.mxu0 0.0
    %49 = vmatprep.subr.mxu0 0.0
    %50 = vmatpush1.msra.mxu0 0.0
    %51 = vmatprep.subr.mxu0 0.0
    %52 = vmatpush1.msra.mxu0 0.0
    %53 = vmatprep.subr.mxu0 0.0
    %54 = vmatpush1.msra.mxu0 0.0
    %55 = vmatprep.subr.mxu0 0.0
    %56 = vmatpush1.msra.mxu0 0.0
    %57 = vmatprep.subr.mxu0 0.0
    %58 = vmatpush1.msra.mxu0 0.0
    %59 = vmatprep.subr.mxu0 0.0
    %60 = vmatpush1.msra.mxu0 0.0
    %61 = vmatprep.subr.mxu0 0.0
    %62 = vmatpush1.msra.mxu0 0.0
    %63 = vmatprep.subr.mxu0 0.0
    %64 = vmatpush1.msra.mxu0 0.0
    %65 = vmatprep.subr.mxu0 0.0
    %66 = vmatpush1.msra.mxu0 0.0
    %67 = vmatprep.subr.mxu0 0.0
    %68 = vmatpush1.msra.mxu0 0.0
    %69 = vmatprep.subr.mxu0 0.0
    %70 = vmatpush1.msra.mxu0 %v37
    %71 = vmatprep.subr.mxu0 0.0
    %72 = vmatpush1.msra.mxu0 %v36
    %73 = vmatprep.subr.mxu0 0.0
    %74 = vmatpush1.msra.mxu0 %v35
    %75 = vmatprep.subr.mxu0 0.0
    %76 = vmatpush1.msra.mxu0 %v34
    %77 = vmatprep.subr.mxu0 0.0
    %78 = vmatpush2.msra.mxu0 0.0
    %79 = vmatprep.subr.mxu0 0.0
    %80 = vmatpush2.msra.mxu0 0.0
    %81 = vmatprep.subr.mxu0 0.0
    %82 = vmatpush2.msra.mxu0 0.0
    %83 = vmatprep.subr.mxu0 0.0
    %84 = vmatpush2.msra.mxu0 0.0
    %85 = vmatprep.subr.mxu0 0.0
    %86 = vmatpush2.msra.mxu0 0.0
    %87 = vmatprep.subr.mxu0 0.0
    %88 = vmatpush2.msra.mxu0 0.0
    %89 = vmatprep.subr.mxu0 0.0
    %90 = vmatpush2.msra.mxu0 0.0
    %91 = vmatprep.subr.mxu0 0.0
    %92 = vmatpush2.msra.mxu0 0.0
    %93 = vmatprep.subr.mxu0 0.0
    %94 = vmatpush2.msra.mxu0 0.0
    %95 = vmatprep.subr.mxu0 0.0
    %96 = vmatpush2.msra.mxu0 0.0
    %97 = vmatprep.subr.mxu0 0.0
    %98 = vmatpush2.msra.mxu0 0.0
    %99 = vmatprep.subr.mxu0 0.0
    %100 = vmatpush2.msra.mxu0 0.0
    %101 = vmatprep.subr.mxu0 0.0
    %102 = vmatpush2.msra.mxu0 0.0
    %103 = vmatprep.subr.mxu0 0.0
    %104 = vmatpush2.msra.mxu0 0.0
    %105 = vmatprep.subr.mxu0 0.0
    %106 = vmatpush2.msra.mxu0 0.0
    %107 = vmatprep.subr.mxu0 0.0
    %108 = vmatpush2.msra.mxu0 0.0
    %109 = vmatprep.mubr.f32.mxu0 0.0
    %110 = vmatmul.mubr.f32.gmra.mxu0 %v40
    %v111 = vpop.f32.mrf.mxu0
    %v112 = vadd.f32 0.0, %v111
    %v113 = vpop.f32.mrf.mxu0
    %114 = vmatprep.mubr.f32.mxu0 0.0
    %115 = vmatmul.mubr.f32.gmra.mxu0 %v43
    %v116 = vpop.f32.mrf.mxu0
    %v117 = vadd.f32 0.0, %v116
    %v118 = vpop.f32.mrf.mxu0
    %119 = vdwg.mxu0
    %v120 = vld [vmem:[%s1] sm:$0xff]
    %v121 = vld [vmem:[%s1 + $0x8] sm:$0xff]
    %v122 = vld [vmem:[%s3] sm:$0x1]
    %v123 = vld [vmem:[%s3 + $0x1] sm:$0x1]
    %v124 = vmul.f32 %v112, 2.0
    %v125 = vmul.f32 %v117, 2.0
    %127 = vset.pattern.permute.xlu0 0
    %128 = vperm.xlu0 %127, %v120
    %v129 = vpop.permute.xlu0 %128
    %132 = vset.pattern.permute.xlu0 0
    %133 = vperm.xlu0 %132, %v121
    %v134 = vpop.permute.xlu0 %133
    %v136 = vsub.f32 %v124, %v129
    %v137 = vsub.f32 %v125, %v134
    %v138 = vlaneseq
    %v139 = vshrl.u32 %v138, 7
    %v140 = vsub.s32 0, %v139
    %v141 = vrot.slane %v122, %v140
    %v142 = vsub.f32 %v136, %v141
    %v143 = vsub.f32 %v137, %v141
    %v144 = vmin.f32 %v142, 0.0
    %v145 = vmin.f32 %v143, 0.0
    %v146 = vmul.f32 %v144, 1.442695
    %v147 = vpow.pop %v146
    %v148 = vmul.f32 %v145, 1.442695
    %v149 = vpow.pop %v148
    %150 = vset.pattern.permute.xlu0 1
    %151 = vperm.xlu0 %150, %v120
    %v152 = vpop.permute.xlu0 %151
    %154 = vset.pattern.permute.xlu0 1
    %155 = vperm.xlu0 %154, %v121
    %v156 = vpop.permute.xlu0 %155
    %v158 = vlaneseq
    %v159 = vshrl.u32 %v158, 7
    %v160 = vsub.s32 0, %v159
    %v161 = vrot.slane %v123, %v160
    %vm162 = vcmp.eq.f32.partialorder %v152, %v161
    %vm163 = vcmp.eq.f32.partialorder %v156, %v161
    %v164 = vsel %vm162, 1, 0
    %v165 = vsel %vm163, 1, 0
    %v166 = vcvt.s32.f32 %v164
    %v167 = vcvt.s32.f32 %v165
    %v168 = vadd.f32 %v147, %v166
    %v169 = vadd.f32 %v149, %v167
    %170 = vst [vmem:[#allocation5] sm:$0xff] %v168
    %171 = vst [vmem:[#allocation5 + $0x8] sm:$0xff] %v169
    // Predicated region
    $region22: #{tpu_custom_call.1} parent=1 // pred_check
      _
    $region23: #{tpu_custom_call.1} parent=1 // pred_check_branch
      %173 = sbr.rel (0) target = $region25
    $region24: #{tpu_custom_call.1} parent=1 // pred_region
      %s175 = ssub.s32 256, 256
      %176 = vsyncadd [#allocation4], %s175
      %s177 = sshll.u32 [#allocation5], 4
      %s178 = int_to_ptr.vmem [resolvable:$true] %s177
      %183 = dma.vmem_to_hbm [thread:$0]  %s178, 256, %s4, [#allocation4], 128, 128, 8
    $region25: #{tpu_custom_call.1} parent=1 // pred_fallthru
      _
    // Predicated region
    $region26: #{tpu_custom_call.1} parent=1 // pred_check
      _
    $region27: #{tpu_custom_call.1} parent=1 // pred_check_branch
      %185 = sbr.rel (0) target = $region29
    $region28: #{tpu_custom_call.1} parent=1 // pred_region
      %186 = dma.done [#allocation4], 256
    $region29: #{tpu_custom_call.1} parent=1 // pred_fallthru
      _
    %187 = vsyncpa [#allocation3], 1
    %188 = vsyncpa [#allocation4], 1

</llo_original>
